<compile_context>
chip_gen: v6e
topology: v6e:2x2x1
jax: 0.10.0
libtpu: 0.0.40
codegen_flags: <defaults>
</compile_context>

<pallas_src>
import jax
import jax.numpy as jnp
from jax.experimental import pallas as pl
from jax.experimental.pallas import tpu as pltpu

MiB = 1024 * 1024


def attention_kernel(q_ref, wenc_ref, vatt_ref, enc_ref, ctx_ref, alpha_ref):
    """One grid step processes TB batch elements over the full sequence.

    q_ref    : (1, D)      hoisted query = decoder_hidden @ W_dec.T   (f32)
    wenc_ref : (D, D)      W_enc.weight.T                             (f32 / bf16)
    vatt_ref : (1, D)      V_att.weight                               (f32)
    enc_ref  : (S, TB, D)  encoder slice, native (seq, batch, dim) layout
    ctx_ref  : (TB, D)     context output block (lane-dense, D last)
    alpha_ref: (TB, S)     attention-weight output block (lane-dense, S last)
    """
    s, tb, d = enc_ref.shape
    enc = enc_ref[...]

    # Keys for all S*TB positions in ONE MXU matmul (M = S*TB).  TB is a multiple
    # of 8 (enforced by the wrapper), so this merge is sublane-aligned and free.
    keys = jnp.dot(enc.reshape(s * tb, d), wenc_ref[...],
                   preferred_element_type=jnp.float32)            # (S*TB, D) f32
    scores = jnp.tanh(keys + q_ref[...])                          # query broadcast

    # V_att projection -> one logit per (seq, batch) position (lane reduction).
    e = jnp.sum(scores * vatt_ref[...], axis=-1,
                keepdims=True).reshape(s, tb, 1)                  # (S, TB, 1)

    # Numerically stable softmax over the sequence axis (axis 0); the divide is a
    # reciprocal-multiply so it lands on the EUP slot instead of the VPU.
    m = jnp.max(e, axis=0, keepdims=True)
    p = jnp.exp(e - m)
    inv = pl.reciprocal(jnp.sum(p, axis=0, keepdims=True))        # exact (approx=False)
    alpha = p * inv                                               # (S, TB, 1) f32

    # context[t, :] = sum_s alpha[s, t] * enc[s, t, :]  (small VPU reduce, hidden
    # under the encoder DMA; f32 accumulation even if enc is bf16).
    ctx_ref[...] = jnp.sum(alpha * enc, axis=0).astype(ctx_ref.dtype)      # (TB, D)

    # Lane-dense alpha store: a single (TB, S) slab per step (tiny S*TB-element XLU
    # transpose) instead of S masked 1-lane stores + a post-kernel transpose.
    alpha_ref[...] = alpha[:, :, 0].T.astype(alpha_ref.dtype)              # (TB, S)


def _round_up(x, m):
    return ((x + m - 1) // m) * m


def _pick_tb(batch, seq, dim, itemsize, *,
             vmem_budget_bytes=32 * MiB, target_block_bytes=4 * MiB):
    """Per-step batch tile.  Always a multiple of 8 (awkward batches are padded by
    the caller), capped so the double-buffered encoder block plus output blocks fit
    the VMEM budget, with a soft target of ~4 MiB per encoder buffer so DMAs are
    long and the MXU matmul rows (M = S*TB) are full."""
    enc_row = seq * dim * itemsize            # encoder bytes per batch element
    out_row = (dim + seq) * 4                 # f32 ctx + alpha rows
    per_tb = 2 * enc_row + 2 * out_row        # double-buffered
    tb_cap = max(8, (vmem_budget_bytes // per_tb) // 8 * 8)
    tb_target = max(8, (target_block_bytes // max(enc_row, 1)) // 8 * 8)
    tb = min(tb_cap, tb_target, _round_up(batch, 8))
    return max(tb, 8)


def attention_forward(decoder_hidden, encoder_out, w_dec, w_enc, v_att, *,
                      use_bf16=False, vmem_budget_bytes=32 * MiB):
    """decoder_hidden: (1, 1, D); encoder_out: (S, B, D) (native torch layout);
    w_dec, w_enc: (D, D) torch-Linear weights (out, in); v_att: (1, D).
    Returns (context (B, 1, D), alpha (1, B, S)), matching the PyTorch module."""
    seq, batch, dim = encoder_out.shape

    # Hoisted, batch-invariant query projection (otherwise a per-step DxD matmul).
    query = (decoder_hidden.reshape(1, dim) @ w_dec.T).astype(jnp.float32)   # (1, D)
    wenc_t = w_enc.T                                                         # x @ W.T
    vatt = v_att.astype(jnp.float32)

    enc = encoder_out
    if use_bf16:
        # Kernel is HBM-bound by the encoder read: bf16 halves that traffic on
        # v6e/v7x.  Keys still accumulate in f32; softmax/context stay f32.
        enc = enc.astype(jnp.bfloat16)
        wenc_t = wenc_t.astype(jnp.bfloat16)

    itemsize = jnp.dtype(enc.dtype).itemsize
    tb = _pick_tb(batch, seq, dim, itemsize, vmem_budget_bytes=vmem_budget_bytes)

    # Pad awkward batches up to a multiple of TB instead of a single giant block
    # (keeps pipelining / megacore; zero rows give a harmless uniform softmax and
    # are sliced off below).
    padded_batch = _round_up(batch, tb)
    if padded_batch != batch:
        enc = jnp.pad(enc, ((0, 0), (0, padded_batch - batch), (0, 0)))
    num_blocks = padded_batch // tb

    # VMEM limit from the actual footprint (<= 48 MiB so it also fits v7x's 64 MiB
    # physical VMEM); estimate conservatively with everything double-buffered.
    footprint = 2 * (seq * tb * dim * itemsize            # encoder block
                     + tb * (dim + seq) * 4               # ctx + alpha blocks
                     + (dim * dim + 2 * dim) * itemsize)  # weights / query / v_att
    vmem_limit = int(min(48 * MiB, max(footprint + 8 * MiB, 16 * MiB)))

    # TODO(synk): for very large S*D (encoder block > budget even at TB=8) add an
    # "arbitrary" sequence grid axis with an online-softmax (m/l/acc) accumulator.

    def run(single_buffer_invariants):
        # Grid-invariant inputs are fetched once; single-buffering them frees VMEM
        # that directly buys a larger TB (matters most at large D under v7x).
        inv_kw = {"pipeline_mode": pl.Buffered(1)} if single_buffer_invariants else {}
        in_specs = [
            pl.BlockSpec((1, dim), lambda b: (0, 0), **inv_kw),       # query
            pl.BlockSpec((dim, dim), lambda b: (0, 0), **inv_kw),     # W_enc^T
            pl.BlockSpec((1, dim), lambda b: (0, 0), **inv_kw),       # V_att
            # Encoder consumed in native (S, B, D) layout: no HBM transpose.
            pl.BlockSpec((seq, tb, dim), lambda b: (0, b, 0)),
        ]
        out_specs = (
            pl.BlockSpec((tb, dim), lambda b: (b, 0)),                # context
            pl.BlockSpec((tb, seq), lambda b: (b, 0)),                # alpha (lane-dense)
        )
        return pl.pallas_call(
            attention_kernel,
            out_shape=(
                jax.ShapeDtypeStruct((padded_batch, dim), jnp.float32),
                jax.ShapeDtypeStruct((padded_batch, seq), jnp.float32),
            ),
            grid=(num_blocks,),
            in_specs=in_specs,
            out_specs=out_specs,
            compiler_params=pltpu.CompilerParams(
                dimension_semantics=("parallel",),        # megacore on v7x when grid >= 2
                vmem_limit_bytes=vmem_limit,
            ),
        )(query, wenc_t, vatt, enc)

    try:
        ctx, alpha2d = run(single_buffer_invariants=True)
    except Exception:  # pragma: no cover - Pallas version without pipeline_mode support
        ctx, alpha2d = run(single_buffer_invariants=False)

    # Only slices / reshapes here (no transpose kernels): outputs are already
    # lane-dense in the layouts the module returns.
    context = ctx[:batch, None, :]              # (B, 1, D)
    alpha_out = alpha2d[:batch][None]           # (1, B, S)
    return context, alpha_out


def reference_forward(decoder_hidden, encoder_out, w_dec, w_enc, v_att):
    """Pure-JAX transcription of the PyTorch forward (for verification)."""
    query = decoder_hidden @ w_dec.T                              # (1, 1, D)
    keys = jnp.transpose(encoder_out, (1, 0, 2)) @ w_enc.T        # (B, S, D)
    scores = keys + query
    e = jnp.tanh(scores) @ v_att.T                                # (B, S, 1)
    alpha = jax.nn.softmax(e, axis=1)
    context = jnp.einsum('bos,bsd->bod',
                         jnp.transpose(alpha, (0, 2, 1)),
                         jnp.transpose(encoder_out, (1, 0, 2)))   # (B, 1, D)
    return context, jnp.transpose(alpha, (2, 0, 1))               # (1, B, S)


if __name__ == "__main__":
    seq, batch, dim = 8, 16, 32

    key = jax.random.PRNGKey(0)
    k_enc, k_dec, k_we, k_wd, k_v = jax.random.split(key, 5)

    encoder_out = jax.random.normal(k_enc, (seq, batch, dim), jnp.float32)
    decoder_hidden = jax.random.normal(k_dec, (1, 1, dim), jnp.float32)

    # Deterministic synthetic parameters (torch nn.Linear weight shapes: (out, in)).
    w_enc = 0.1 * jax.random.normal(k_we, (dim, dim), jnp.float32)   # W_enc.weight
    w_dec = 0.1 * jax.random.normal(k_wd, (dim, dim), jnp.float32)   # W_dec.weight
    v_att = 0.1 * jax.random.normal(k_v, (1, dim), jnp.float32)      # V_att.weight

    ctx, alpha = attention_forward(decoder_hidden, encoder_out, w_dec, w_enc, v_att)
    jax.block_until_ready((ctx, alpha))

    ctx_ref, alpha_ref = reference_forward(decoder_hidden, encoder_out,
                                           w_dec, w_enc, v_att)
    assert ctx.shape == (batch, 1, dim) and alpha.shape == (1, batch, seq)
    assert jnp.allclose(ctx, ctx_ref, atol=1e-5, rtol=1e-5)
    assert jnp.allclose(alpha, alpha_ref, atol=1e-5, rtol=1e-5)

    print("KERNEL_OK")
</pallas_src>

<mosaic_0001>
module attributes {stable_mosaic.version = 11 : i64} {
  func.func @attention_kernel(%arg0: i32, %arg1: memref<1x32xf32, #tpu.memory_space<vmem>>, %arg2: memref<32x32xf32, #tpu.memory_space<vmem>>, %arg3: memref<1x32xf32, #tpu.memory_space<vmem>>, %arg4: memref<8x16x32xf32, #tpu.memory_space<vmem>>, %arg5: memref<16x32xf32, #tpu.memory_space<vmem>>, %arg6: memref<16x8xf32, #tpu.memory_space<vmem>>) attributes {dimension_semantics = [#tpu.dimension_semantics<parallel>], iteration_bounds = array<i64: 1>, scalar_prefetch = 0 : i64, scratch_operands = 0 : i64, tpu.core_type = #tpu.core_type<tc>, window_params = [{pipeline_mode = #tpu.pipeline_mode<synchronous>, transform_indices = @transform_0, window_bounds = array<i64: 1, 32>}, {pipeline_mode = #tpu.pipeline_mode<synchronous>, transform_indices = @transform_1, window_bounds = array<i64: 32, 32>}, {pipeline_mode = #tpu.pipeline_mode<synchronous>, transform_indices = @transform_2, window_bounds = array<i64: 1, 32>}, {transform_indices = @transform_3, window_bounds = array<i64: 8, 16, 32>}, {transform_indices = @transform_4, window_bounds = array<i64: 16, 32>}, {transform_indices = @transform_5, window_bounds = array<i64: 16, 8>}]} {
    %c0 = arith.constant 0 : index
    %c0_0 = arith.constant 0 : index
    %c0_1 = arith.constant 0 : index
    %0 = vector.load %arg4[%c0, %c0_0, %c0_1] : memref<8x16x32xf32, #tpu.memory_space<vmem>>, vector<8x16x32xf32>
    %1 = vector.shape_cast %0 : vector<8x16x32xf32> to vector<128x32xf32>
    %c0_2 = arith.constant 0 : index
    %c0_3 = arith.constant 0 : index
    %2 = vector.load %arg2[%c0_2, %c0_3] : memref<32x32xf32, #tpu.memory_space<vmem>>, vector<32x32xf32>
    %cst = arith.constant dense<0.000000e+00> : vector<128x32xf32>
    %3 = tpu.matmul %1, %2, %cst {dimension_numbers = #tpu.dot_dimension_numbers<[1], [0], [0], [1], [0, 0, 1, 1], [], []>} : vector<128x32xf32>, vector<32x32xf32>, vector<128x32xf32> -> vector<128x32xf32>
    %c0_4 = arith.constant 0 : index
    %c0_5 = arith.constant 0 : index
    %4 = vector.load %arg1[%c0_4, %c0_5] : memref<1x32xf32, #tpu.memory_space<vmem>>, vector<1x32xf32>
    %5 = vector.broadcast %4 : vector<1x32xf32> to vector<128x32xf32>
    %6 = arith.addf %3, %5 : vector<128x32xf32>
    %7 = math.tanh %6 : vector<128x32xf32>
    %c0_6 = arith.constant 0 : index
    %c0_7 = arith.constant 0 : index
    %8 = vector.load %arg3[%c0_6, %c0_7] : memref<1x32xf32, #tpu.memory_space<vmem>>, vector<1x32xf32>
    %9 = vector.broadcast %8 : vector<1x32xf32> to vector<128x32xf32>
    %10 = arith.mulf %7, %9 : vector<128x32xf32>
    %cst_8 = arith.constant dense<0.000000e+00> : vector<128xf32>
    %11 = vector.multi_reduction <add>, %10, %cst_8 [1] : vector<128x32xf32> to vector<128xf32>
    %12 = vector.shape_cast %11 : vector<128xf32> to vector<128x1xf32>
    %13 = vector.shape_cast %12 : vector<128x1xf32> to vector<8x16x1xf32>
    %cst_9 = arith.constant dense<0xFF800000> : vector<16x1xf32>
    %14 = vector.multi_reduction <maximumf>, %13, %cst_9 [0] : vector<8x16x1xf32> to vector<16x1xf32>
    %15 = vector.shape_cast %14 : vector<16x1xf32> to vector<1x16x1xf32>
    %16 = vector.broadcast %15 : vector<1x16x1xf32> to vector<8x16x1xf32>
    %17 = arith.subf %13, %16 : vector<8x16x1xf32>
    %18 = math.exp %17 : vector<8x16x1xf32>
    %cst_10 = arith.constant dense<0.000000e+00> : vector<16x1xf32>
    %19 = vector.multi_reduction <add>, %18, %cst_10 [0] : vector<8x16x1xf32> to vector<16x1xf32>
    %20 = vector.shape_cast %19 : vector<16x1xf32> to vector<1x16x1xf32>
    %21 = tpu.reciprocal %20 : vector<1x16x1xf32> -> vector<1x16x1xf32>
    %22 = vector.broadcast %21 : vector<1x16x1xf32> to vector<8x16x1xf32>
    %23 = arith.mulf %18, %22 : vector<8x16x1xf32>
    %24 = vector.broadcast %23 : vector<8x16x1xf32> to vector<8x16x32xf32>
    %25 = arith.mulf %24, %0 : vector<8x16x32xf32>
    %cst_11 = arith.constant dense<0.000000e+00> : vector<16x32xf32>
    %26 = vector.multi_reduction <add>, %25, %cst_11 [0] : vector<8x16x32xf32> to vector<16x32xf32>
    %c0_12 = arith.constant 0 : index
    %c0_13 = arith.constant 0 : index
    %27 = vector.load %arg5[%c0_12, %c0_13] : memref<16x32xf32, #tpu.memory_space<vmem>>, vector<16x32xf32>
    tpu.vector_store %arg5[%c0_12, %c0_13], %26 {strides = array<i32>} : memref<16x32xf32, #tpu.memory_space<vmem>>, vector<16x32xf32>,
    %28 = vector.shape_cast %23 : vector<8x16x1xf32> to vector<8x16xf32>
    %29 = tpu.transpose %28, [1, 0] : vector<8x16xf32> -> vector<16x8xf32>
    %c0_14 = arith.constant 0 : index
    %c0_15 = arith.constant 0 : index
    %30 = vector.load %arg6[%c0_14, %c0_15] : memref<16x8xf32, #tpu.memory_space<vmem>>, vector<16x8xf32>
    tpu.vector_store %arg6[%c0_14, %c0_15], %29 {strides = array<i32>} : memref<16x8xf32, #tpu.memory_space<vmem>>, vector<16x8xf32>,
    return
  }
  func.func @transform_0(%arg0: i32) -> (i32, i32) {
    %c0_i32 = arith.constant 0 : i32
    %c0_i32_0 = arith.constant 0 : i32
    %c0_i32_1 = arith.constant 0 : i32
    return %c0_i32, %c0_i32_0 : i32, i32
  }
  func.func @transform_1(%arg0: i32) -> (i32, i32) {
    %c0_i32 = arith.constant 0 : i32
    %c0_i32_0 = arith.constant 0 : i32
    %c0_i32_1 = arith.constant 0 : i32
    return %c0_i32, %c0_i32_0 : i32, i32
  }
  func.func @transform_2(%arg0: i32) -> (i32, i32) {
    %c0_i32 = arith.constant 0 : i32
    %c0_i32_0 = arith.constant 0 : i32
    %c0_i32_1 = arith.constant 0 : i32
    return %c0_i32, %c0_i32_0 : i32, i32
  }
  func.func @transform_3(%arg0: i32) -> (i32, i32, i32) {
    %c0_i32 = arith.constant 0 : i32
    %c0_i32_0 = arith.constant 0 : i32
    %c0_i32_1 = arith.constant 0 : i32
    return %c0_i32, %arg0, %c0_i32_0 : i32, i32, i32
  }
  func.func @transform_4(%arg0: i32) -> (i32, i32) {
    %c0_i32 = arith.constant 0 : i32
    %c0_i32_0 = arith.constant 0 : i32
    return %arg0, %c0_i32 : i32, i32
  }
  func.func @transform_5(%arg0: i32) -> (i32, i32) {
    %c0_i32 = arith.constant 0 : i32
    %c0_i32_0 = arith.constant 0 : i32
    return %arg0, %c0_i32 : i32, i32
  }
}

module attributes {stable_mosaic.version = 11 : i64} {
  func.func @attention_kernel(%arg0: i32, %arg1: memref<1x32xf32, #tpu.memory_space<vmem>>, %arg2: memref<32x32xf32, #tpu.memory_space<vmem>>, %arg3: memref<1x32xf32, #tpu.memory_space<vmem>>, %arg4: memref<8x16x32xf32, #tpu.memory_space<vmem>>, %arg5: memref<16x32xf32, #tpu.memory_space<vmem>>, %arg6: memref<16x8xf32, #tpu.memory_space<vmem>>) attributes {dimension_semantics = [#tpu.dimension_semantics<parallel>], iteration_bounds = array<i64: 1>, scalar_prefetch = 0 : i64, scratch_operands = 0 : i64, tpu.core_type = #tpu.core_type<tc>, window_params = [{pipeline_mode = #tpu.pipeline_mode<synchronous>, transform_indices = @transform_0, window_bounds = array<i64: 1, 32>}, {pipeline_mode = #tpu.pipeline_mode<synchronous>, transform_indices = @transform_1, window_bounds = array<i64: 32, 32>}, {pipeline_mode = #tpu.pipeline_mode<synchronous>, transform_indices = @transform_2, window_bounds = array<i64: 1, 32>}, {transform_indices = @transform_3, window_bounds = array<i64: 8, 16, 32>}, {transform_indices = @transform_4, window_bounds = array<i64: 16, 32>}, {transform_indices = @transform_5, window_bounds = array<i64: 16, 8>}]} {
    %c0 = arith.constant 0 : index
    %c0_0 = arith.constant 0 : index
    %c0_1 = arith.constant 0 : index
    %0 = vector.load %arg4[%c0, %c0_0, %c0_1] : memref<8x16x32xf32, #tpu.memory_space<vmem>>, vector<8x16x32xf32>
    %1 = vector.shape_cast %0 : vector<8x16x32xf32> to vector<128x32xf32>
    %c0_2 = arith.constant 0 : index
    %c0_3 = arith.constant 0 : index
    %2 = vector.load %arg2[%c0_2, %c0_3] : memref<32x32xf32, #tpu.memory_space<vmem>>, vector<32x32xf32>
    %cst = arith.constant dense<0.000000e+00> : vector<128x32xf32>
    %3 = tpu.matmul %1, %2, %cst {dimension_numbers = #tpu.dot_dimension_numbers<[1], [0], [0], [1], [0, 0, 1, 1], [], []>} : vector<128x32xf32>, vector<32x32xf32>, vector<128x32xf32> -> vector<128x32xf32>
    %c0_4 = arith.constant 0 : index
    %c0_5 = arith.constant 0 : index
    %4 = vector.load %arg1[%c0_4, %c0_5] : memref<1x32xf32, #tpu.memory_space<vmem>>, vector<1x32xf32>
    %5 = vector.broadcast %4 : vector<1x32xf32> to vector<128x32xf32>
    %6 = arith.addf %3, %5 : vector<128x32xf32>
    %7 = math.tanh %6 : vector<128x32xf32>
    %c0_6 = arith.constant 0 : index
    %c0_7 = arith.constant 0 : index
    %8 = vector.load %arg3[%c0_6, %c0_7] : memref<1x32xf32, #tpu.memory_space<vmem>>, vector<1x32xf32>
    %9 = vector.broadcast %8 : vector<1x32xf32> to vector<128x32xf32>
    %10 = arith.mulf %7, %9 : vector<128x32xf32>
    %cst_8 = arith.constant dense<0.000000e+00> : vector<128xf32>
    %11 = vector.multi_reduction <add>, %10, %cst_8 [1] : vector<128x32xf32> to vector<128xf32>
    %12 = vector.shape_cast %11 : vector<128xf32> to vector<128x1xf32>
    %13 = vector.shape_cast %12 : vector<128x1xf32> to vector<8x16x1xf32>
    %cst_9 = arith.constant dense<0xFF800000> : vector<16x1xf32>
    %14 = vector.multi_reduction <maximumf>, %13, %cst_9 [0] : vector<8x16x1xf32> to vector<16x1xf32>
    %15 = vector.shape_cast %14 : vector<16x1xf32> to vector<1x16x1xf32>
    %16 = vector.broadcast %15 : vector<1x16x1xf32> to vector<8x16x1xf32>
    %17 = arith.subf %13, %16 : vector<8x16x1xf32>
    %18 = math.exp %17 : vector<8x16x1xf32>
    %cst_10 = arith.constant dense<0.000000e+00> : vector<16x1xf32>
    %19 = vector.multi_reduction <add>, %18, %cst_10 [0] : vector<8x16x1xf32> to vector<16x1xf32>
    %20 = vector.shape_cast %19 : vector<16x1xf32> to vector<1x16x1xf32>
    %21 = tpu.reciprocal %20 : vector<1x16x1xf32> -> vector<1x16x1xf32>
    %22 = vector.broadcast %21 : vector<1x16x1xf32> to vector<8x16x1xf32>
    %23 = arith.mulf %18, %22 : vector<8x16x1xf32>
    %24 = vector.broadcast %23 : vector<8x16x1xf32> to vector<8x16x32xf32>
    %25 = arith.mulf %24, %0 : vector<8x16x32xf32>
    %cst_11 = arith.constant dense<0.000000e+00> : vector<16x32xf32>
    %26 = vector.multi_reduction <add>, %25, %cst_11 [0] : vector<8x16x32xf32> to vector<16x32xf32>
    %c0_12 = arith.constant 0 : index
    %c0_13 = arith.constant 0 : index
    %27 = vector.load %arg5[%c0_12, %c0_13] : memref<16x32xf32, #tpu.memory_space<vmem>>, vector<16x32xf32>
    tpu.vector_store %arg5[%c0_12, %c0_13], %26 {strides = array<i32>} : memref<16x32xf32, #tpu.memory_space<vmem>>, vector<16x32xf32>,
    %28 = vector.shape_cast %23 : vector<8x16x1xf32> to vector<8x16xf32>
    %29 = tpu.transpose %28, [1, 0] : vector<8x16xf32> -> vector<16x8xf32>
    %c0_14 = arith.constant 0 : index
    %c0_15 = arith.constant 0 : index
    %30 = vector.load %arg6[%c0_14, %c0_15] : memref<16x8xf32, #tpu.memory_space<vmem>>, vector<16x8xf32>
    tpu.vector_store %arg6[%c0_14, %c0_15], %29 {strides = array<i32>} : memref<16x8xf32, #tpu.memory_space<vmem>>, vector<16x8xf32>,
    return
  }
  func.func @transform_0(%arg0: i32) -> (i32, i32) {
    %c0_i32 = arith.constant 0 : i32
    %c0_i32_0 = arith.constant 0 : i32
    %c0_i32_1 = arith.constant 0 : i32
    return %c0_i32, %c0_i32_0 : i32, i32
  }
  func.func @transform_1(%arg0: i32) -> (i32, i32) {
    %c0_i32 = arith.constant 0 : i32
    %c0_i32_0 = arith.constant 0 : i32
    %c0_i32_1 = arith.constant 0 : i32
    return %c0_i32, %c0_i32_0 : i32, i32
  }
  func.func @transform_2(%arg0: i32) -> (i32, i32) {
    %c0_i32 = arith.constant 0 : i32
    %c0_i32_0 = arith.constant 0 : i32
    %c0_i32_1 = arith.constant 0 : i32
    return %c0_i32, %c0_i32_0 : i32, i32
  }
  func.func @transform_3(%arg0: i32) -> (i32, i32, i32) {
    %c0_i32 = arith.constant 0 : i32
    %c0_i32_0 = arith.constant 0 : i32
    %c0_i32_1 = arith.constant 0 : i32
    return %c0_i32, %arg0, %c0_i32_0 : i32, i32, i32
  }
  func.func @transform_4(%arg0: i32) -> (i32, i32) {
    %c0_i32 = arith.constant 0 : i32
    %c0_i32_0 = arith.constant 0 : i32
    return %arg0, %c0_i32 : i32, i32
  }
  func.func @transform_5(%arg0: i32) -> (i32, i32) {
    %c0_i32 = arith.constant 0 : i32
    %c0_i32_0 = arith.constant 0 : i32
    return %arg0, %c0_i32 : i32, i32
  }
}

</mosaic_0001>

<llo_original>
// kernel: tpu_custom_call.1
$region0: #{tpu_custom_call.1}
  #allocation0 [shape = 'u32[]', space=smem, size = 0x4, offset = 0x4, fixed_abs, tag = 'smem constant byte address 0x4 - core index']
  #allocation1 [shape = 'u32[144,128]{1,0:T(1,128)}', space=vmem, size = 0x12000, scoped, tag = 'internal scratch']
  %s0 = inlined_call_operand.hbm [shape: f32[1,32], index: 0, kind: input, shape index: {}]
  %s1 = inlined_call_operand.hbm [shape: f32[32,32], index: 1, kind: input, shape index: {}]
  %s2 = inlined_call_operand.vmem [shape: f32[1,32], index: 2, kind: input, shape index: {}]
  %s3 = inlined_call_operand.hbm [shape: f32[8,16,32], index: 3, kind: input, shape index: {}]
  %s4 = inlined_call_operand.hbm [shape: f32[16,32], index: 4, kind: output, shape index: {0}]
  %s5 = inlined_call_operand.vmem [shape: f32[16,8], index: 5, kind: output, shape index: {1}]
  %6 = xla_tuple %s4, %s5
  %s7 = sld [smem:[#allocation0]]
  $region46: #{tpu_custom_call.1} parent=0
    _
  %s9 = ssub.s32 1, %s7
  %s10 = scalar_select 0, %s9, %s7
  $region1: #{tpu_custom_call.1} parent=0
    #allocation2 [shape = 'u8[512]{0}', space=vmem, size = 0x400, scoped, tag = 'input window, operand 0, single buffered']
    #allocation3 [shape = 's32[1]{0}', space=sflag, size = 0x4, scoped, tag = 'scoped memory for tpu_custom_call.1']
    #allocation4 [shape = 's32[1]{0}', space=sflag, size = 0x4, scoped, tag = 'scoped memory for tpu_custom_call.1']
    #allocation5 [shape = 'u8[16384]{0}', space=vmem, size = 0x4000, scoped, tag = 'input window, operand 1, single buffered']
    #allocation6 [shape = 's32[1]{0}', space=sflag, size = 0x4, scoped, tag = 'scoped memory for tpu_custom_call.1']
    #allocation7 [shape = 'u8[65536]{0}', space=vmem, size = 0x10000, scoped, tag = 'input window, operand 3, single buffered']
    #allocation8 [shape = 'u8[8192]{0}', space=vmem, size = 0x2000, scoped, tag = 'output window, operand 0, single buffered']
    %11 = vsyncpa [#allocation3], 0
    %12 = vsyncpa [#allocation6], 0
    %13 = vsyncpa [#allocation4], 0
    // Predicated region
    $region2: #{tpu_custom_call.1} parent=1 // pred_check
      _
    $region3: #{tpu_custom_call.1} parent=1 // pred_check_branch
      %15 = sbr.rel (0) target = $region5
    $region4: #{tpu_custom_call.1} parent=1 // pred_region
      %s17 = ssub.s32 16, 16
      %18 = vsyncadd [#allocation3], %s17
      %s20 = sshll.u32 [#allocation2], 4
      %s21 = int_to_ptr.vmem [resolvable:$true] %s20
      %23 = dma.hbm_to_vmem [thread:$0]  %s0, 16, %s21, [#allocation3]
    $region5: #{tpu_custom_call.1} parent=1 // pred_fallthru
      _
    // Predicated region
    $region6: #{tpu_custom_call.1} parent=1 // pred_check
      _
    $region7: #{tpu_custom_call.1} parent=1 // pred_check_branch
      %25 = sbr.rel (0) target = $region9
    $region8: #{tpu_custom_call.1} parent=1 // pred_region
      %s27 = ssub.s32 512, 512
      %28 = vsyncadd [#allocation6], %s27
      %s29 = sshll.u32 [#allocation5], 4
      %s30 = int_to_ptr.vmem [resolvable:$true] %s29
      %35 = dma.hbm_to_vmem [thread:$0]  %s1, 512, %s30, [#allocation6], 128, 128, 8
    $region9: #{tpu_custom_call.1} parent=1 // pred_fallthru
      _
    // Predicated region
    $region10: #{tpu_custom_call.1} parent=1 // pred_check
      _
    $region11: #{tpu_custom_call.1} parent=1 // pred_check_branch
      %37 = sbr.rel (0) target = $region13
    $region12: #{tpu_custom_call.1} parent=1 // pred_region
      _
    $region13: #{tpu_custom_call.1} parent=1 // pred_fallthru
      _
    // Predicated region
    $region14: #{tpu_custom_call.1} parent=1 // pred_check
      _
    $region15: #{tpu_custom_call.1} parent=1 // pred_check_branch
      %39 = sbr.rel (0) target = $region17
    $region16: #{tpu_custom_call.1} parent=1 // pred_region
      %s41 = ssub.s32 2048, 2048
      %42 = vsyncadd [#allocation6], %s41
      %s43 = sshll.u32 [#allocation7], 4
      %s44 = int_to_ptr.vmem [resolvable:$true] %s43
      %49 = dma.hbm_to_vmem [thread:$0]  %s3, 2048, %s44, [#allocation6], 128, 128, 8
    $region17: #{tpu_custom_call.1} parent=1 // pred_fallthru
      _
    // Predicated region
    $region18: #{tpu_custom_call.1} parent=1 // pred_check
      _
    $region19: #{tpu_custom_call.1} parent=1 // pred_check_branch
      %51 = sbr.rel (0) target = $region21
    $region20: #{tpu_custom_call.1} parent=1 // pred_region
      %52 = dma.done [#allocation3], 16
    $region21: #{tpu_custom_call.1} parent=1 // pred_fallthru
      _
    // Predicated region
    $region22: #{tpu_custom_call.1} parent=1 // pred_check
      _
    $region23: #{tpu_custom_call.1} parent=1 // pred_check_branch
      %54 = sbr.rel (0) target = $region25
    $region24: #{tpu_custom_call.1} parent=1 // pred_region
      %55 = dma.done [#allocation6], 512
    $region25: #{tpu_custom_call.1} parent=1 // pred_fallthru
      _
    // Predicated region
    $region26: #{tpu_custom_call.1} parent=1 // pred_check
      _
    $region27: #{tpu_custom_call.1} parent=1 // pred_check_branch
      %57 = sbr.rel (0) target = $region29
    $region28: #{tpu_custom_call.1} parent=1 // pred_region
      %58 = dma.done [#allocation6], 2048
    $region29: #{tpu_custom_call.1} parent=1 // pred_fallthru
      _
    %v59 = vld [vmem:[#allocation7] sm:$0xff]
    %v60 = vld [vmem:[#allocation7 + $0x8] sm:$0xff]
    %v61 = vld [vmem:[#allocation7 + $0x10] sm:$0xff]
    %v62 = vld [vmem:[#allocation7 + $0x18] sm:$0xff]
    %v63 = vld [vmem:[#allocation7 + $0x20] sm:$0xff]
    %v64 = vld [vmem:[#allocation7 + $0x28] sm:$0xff]
    %v65 = vld [vmem:[#allocation7 + $0x30] sm:$0xff]
    %v66 = vld [vmem:[#allocation7 + $0x38] sm:$0xff]
    %v67 = vld [vmem:[#allocation7 + $0x40] sm:$0xff]
    %v68 = vld [vmem:[#allocation7 + $0x48] sm:$0xff]
    %v69 = vld [vmem:[#allocation7 + $0x50] sm:$0xff]
    %v70 = vld [vmem:[#allocation7 + $0x58] sm:$0xff]
    %v71 = vld [vmem:[#allocation7 + $0x60] sm:$0xff]
    %v72 = vld [vmem:[#allocation7 + $0x68] sm:$0xff]
    %v73 = vld [vmem:[#allocation7 + $0x70] sm:$0xff]
    %v74 = vld [vmem:[#allocation7 + $0x78] sm:$0xff]
    %v75 = vld [vmem:[#allocation5] sm:$0xff]
    %v76 = vld [vmem:[#allocation5 + $0x8] sm:$0xff]
    %v77 = vld [vmem:[#allocation5 + $0x10] sm:$0xff]
    %v78 = vld [vmem:[#allocation5 + $0x18] sm:$0xff]
    %v79 = vld [vmem:[#allocation2] sm:$0x1]
    %v81 = vlaneseq
    %v82 = vshrl.u32 %v81, 7
    %v83 = vsub.s32 0, %v82
    %v84 = vrot.slane %v79, %v83
    %vm86 = vcmask 261120
    %v88 = vsel %vm86, %v59, 0
    %v91 = vsel %vm86, %v60, 0
    %v94 = vsel %vm86, %v61, 0
    %v97 = vsel %vm86, %v62, 0
    %v100 = vsel %vm86, %v63, 0
    %v103 = vsel %vm86, %v64, 0
    %v106 = vsel %vm86, %v65, 0
    %v109 = vsel %vm86, %v66, 0
    %v112 = vsel %vm86, %v67, 0
    %v115 = vsel %vm86, %v68, 0
    %v118 = vsel %vm86, %v69, 0
    %v121 = vsel %vm86, %v70, 0
    %v124 = vsel %vm86, %v71, 0
    %v127 = vsel %vm86, %v72, 0
    %v130 = vsel %vm86, %v73, 0
    %v133 = vsel %vm86, %v74, 0
    %135 = vmatprep.subr.mxu0 0.0
    %136 = vmatpush1.msra.mxu0 0.0
    %137 = vmatprep.subr.mxu0 0.0
    %138 = vmatpush1.msra.mxu0 0.0
    %139 = vmatprep.subr.mxu0 0.0
    %140 = vmatpush1.msra.mxu0 0.0
    %141 = vmatprep.subr.mxu0 0.0
    %142 = vmatpush1.msra.mxu0 0.0
    %143 = vmatprep.subr.mxu0 0.0
    %144 = vmatpush1.msra.mxu0 0.0
    %145 = vmatprep.subr.mxu0 0.0
    %146 = vmatpush1.msra.mxu0 0.0
    %147 = vmatprep.subr.mxu0 0.0
    %148 = vmatpush1.msra.mxu0 0.0
    %149 = vmatprep.subr.mxu0 0.0
    %150 = vmatpush1.msra.mxu0 0.0
    %151 = vmatprep.subr.mxu0 0.0
    %152 = vmatpush1.msra.mxu0 0.0
    %153 = vmatprep.subr.mxu0 0.0
    %154 = vmatpush1.msra.mxu0 0.0
    %155 = vmatprep.subr.mxu0 0.0
    %156 = vmatpush1.msra.mxu0 0.0
    %157 = vmatprep.subr.mxu0 0.0
    %158 = vmatpush1.msra.mxu0 0.0
    %159 = vmatprep.subr.mxu0 0.0
    %160 = vmatpush1.msra.mxu0 %v78
    %161 = vmatprep.subr.mxu0 0.0
    %162 = vmatpush1.msra.mxu0 %v77
    %163 = vmatprep.subr.mxu0 0.0
    %164 = vmatpush1.msra.mxu0 %v76
    %165 = vmatprep.subr.mxu0 0.0
    %166 = vmatpush1.msra.mxu0 %v75
    %167 = vmatprep.subr.mxu0 0.0
    %168 = vmatpush2.msra.mxu0 0.0
    %169 = vmatprep.subr.mxu0 0.0
    %170 = vmatpush2.msra.mxu0 0.0
    %171 = vmatprep.subr.mxu0 0.0
    %172 = vmatpush2.msra.mxu0 0.0
    %173 = vmatprep.subr.mxu0 0.0
    %174 = vmatpush2.msra.mxu0 0.0
    %175 = vmatprep.subr.mxu0 0.0
    %176 = vmatpush2.msra.mxu0 0.0
    %177 = vmatprep.subr.mxu0 0.0
    %178 = vmatpush2.msra.mxu0 0.0
    %179 = vmatprep.subr.mxu0 0.0
    %180 = vmatpush2.msra.mxu0 0.0
    %181 = vmatprep.subr.mxu0 0.0
    %182 = vmatpush2.msra.mxu0 0.0
    %183 = vmatprep.subr.mxu0 0.0
    %184 = vmatpush2.msra.mxu0 0.0
    %185 = vmatprep.subr.mxu0 0.0
    %186 = vmatpush2.msra.mxu0 0.0
    %187 = vmatprep.subr.mxu0 0.0
    %188 = vmatpush2.msra.mxu0 0.0
    %189 = vmatprep.subr.mxu0 0.0
    %190 = vmatpush2.msra.mxu0 0.0
    %191 = vmatprep.subr.mxu0 0.0
    %192 = vmatpush2.msra.mxu0 0.0
    %193 = vmatprep.subr.mxu0 0.0
    %194 = vmatpush2.msra.mxu0 0.0
    %195 = vmatprep.subr.mxu0 0.0
    %196 = vmatpush2.msra.mxu0 0.0
    %197 = vmatprep.subr.mxu0 0.0
    %198 = vmatpush2.msra.mxu0 0.0
    %199 = vmatprep.mubr.f32.mxu0 0.0
    %200 = vmatmul.mubr.f32.gmra.mxu0 %v88
    %v201 = vpop.f32.mrf.mxu0
    %v202 = vadd.f32 %v84, %v201
    %v203 = vpop.f32.mrf.mxu0
    %204 = vmatprep.mubr.f32.mxu0 0.0
    %205 = vmatmul.mubr.f32.gmra.mxu0 %v91
    %v206 = vpop.f32.mrf.mxu0
    %v207 = vadd.f32 %v84, %v206
    %v208 = vpop.f32.mrf.mxu0
    %209 = vmatprep.mubr.f32.mxu0 0.0
    %210 = vmatmul.mubr.f32.gmra.mxu0 %v94
    %v211 = vpop.f32.mrf.mxu0
    %v212 = vadd.f32 %v84, %v211
    %v213 = vpop.f32.mrf.mxu0
    %214 = vmatprep.mubr.f32.mxu0 0.0
    %215 = vmatmul.mubr.f32.gmra.mxu0 %v97
    %v216 = vpop.f32.mrf.mxu0
    %v217 = vadd.f32 %v84, %v216
    %v218 = vpop.f32.mrf.mxu0
    %219 = vmatprep.mubr.f32.mxu0 0.0
    %220 = vmatmul.mubr.f32.gmra.mxu0 %v100
    %v221 = vpop.f32.mrf.mxu0
    %v222 = vadd.f32 %v84, %v221
    %v223 = vpop.f32.mrf.mxu0
    %224 = vmatprep.mubr.f32.mxu0 0.0
    %225 = vmatmul.mubr.f32.gmra.mxu0 %v103
    %v226 = vpop.f32.mrf.mxu0
    %v227 = vadd.f32 %v84, %v226
    %v228 = vpop.f32.mrf.mxu0
    %229 = vmatprep.mubr.f32.mxu0 0.0
    %230 = vmatmul.mubr.f32.gmra.mxu0 %v106
    %v231 = vpop.f32.mrf.mxu0
    %v232 = vadd.f32 %v84, %v231
    %v233 = vpop.f32.mrf.mxu0
    %234 = vmatprep.mubr.f32.mxu0 0.0
    %235 = vmatmul.mubr.f32.gmra.mxu0 %v109
    %v236 = vpop.f32.mrf.mxu0
    %v237 = vadd.f32 %v84, %v236
    %v238 = vpop.f32.mrf.mxu0
    %239 = vmatprep.mubr.f32.mxu0 0.0
    %240 = vmatmul.mubr.f32.gmra.mxu0 %v112
    %v241 = vpop.f32.mrf.mxu0
    %v242 = vadd.f32 %v84, %v241
    %v243 = vpop.f32.mrf.mxu0
    %244 = vmatprep.mubr.f32.mxu0 0.0
    %245 = vmatmul.mubr.f32.gmra.mxu0 %v115
    %v246 = vpop.f32.mrf.mxu0
    %v247 = vadd.f32 %v84, %v246
    %v248 = vpop.f32.mrf.mxu0
    %249 = vmatprep.mubr.f32.mxu0 0.0
    %250 = vmatmul.mubr.f32.gmra.mxu0 %v118
    %v251 = vpop.f32.mrf.mxu0
    %v252 = vadd.f32 %v84, %v251
    %v253 = vpop.f32.mrf.mxu0
    %254 = vmatprep.mubr.f32.mxu0 0.0
    %255 = vmatmul.mubr.f32.gmra.mxu0 %v121
    %v256 = vpop.f32.mrf.mxu0
    %v257 = vadd.f32 %v84, %v256
    %v258 = vpop.f32.mrf.mxu0
    %259 = vmatprep.mubr.f32.mxu0 0.0
    %260 = vmatmul.mubr.f32.gmra.mxu0 %v124
    %v261 = vpop.f32.mrf.mxu0
    %v262 = vadd.f32 %v84, %v261
    %v263 = vpop.f32.mrf.mxu0
    %264 = vmatprep.mubr.f32.mxu0 0.0
    %265 = vmatmul.mubr.f32.gmra.mxu0 %v127
    %v266 = vpop.f32.mrf.mxu0
    %v267 = vadd.f32 %v84, %v266
    %v268 = vpop.f32.mrf.mxu0
    %269 = vmatprep.mubr.f32.mxu0 0.0
    %270 = vmatmul.mubr.f32.gmra.mxu0 %v130
    %v271 = vpop.f32.mrf.mxu0
    %v272 = vadd.f32 %v84, %v271
    %v273 = vpop.f32.mrf.mxu0
    %274 = vmatprep.mubr.f32.mxu0 0.0
    %275 = vmatmul.mubr.f32.gmra.mxu0 %v133
    %v276 = vpop.f32.mrf.mxu0
    %v277 = vadd.f32 %v84, %v276
    %v278 = vpop.f32.mrf.mxu0
    %279 = vdwg.mxu0
    %v280 = vtanh.pop %v202
    %v281 = vtanh.pop %v207
    %v282 = vtanh.pop %v212
    %v283 = vtanh.pop %v217
    %v284 = vtanh.pop %v222
    %v285 = vtanh.pop %v227
    %v286 = vtanh.pop %v232
    %v287 = vtanh.pop %v237
    %v288 = vtanh.pop %v242
    %v289 = vtanh.pop %v247
    %v290 = vtanh.pop %v252
    %v291 = vtanh.pop %v257
    %v292 = vtanh.pop %v262
    %v293 = vtanh.pop %v267
    %v294 = vtanh.pop %v272
    %v295 = vtanh.pop %v277
    %v296 = vld [vmem:[%s2] sm:$0x1]
    %v298 = vlaneseq
    %v299 = vshrl.u32 %v298, 7
    %v300 = vsub.s32 0, %v299
    %v301 = vrot.slane %v296, %v300
    %v303 = vmul.f32 %v280, %v301
    %v304 = vmul.f32 %v281, %v301
    %v305 = vmul.f32 %v282, %v301
    %v306 = vmul.f32 %v283, %v301
    %v307 = vmul.f32 %v284, %v301
    %v308 = vmul.f32 %v285, %v301
    %v309 = vmul.f32 %v286, %v301
    %v310 = vmul.f32 %v287, %v301
    %v311 = vmul.f32 %v288, %v301
    %v312 = vmul.f32 %v289, %v301
    %v313 = vmul.f32 %v290, %v301
    %v314 = vmul.f32 %v291, %v301
    %v315 = vmul.f32 %v292, %v301
    %v316 = vmul.f32 %v293, %v301
    %v317 = vmul.f32 %v294, %v301
    %v318 = vmul.f32 %v295, %v301
    %v319 = vsel %vm86, %v303, 0.0
    %320 = vadd.xlane.f32.xlu0 %v319
    %v321 = vpop.xlane.xlu0 %320
    %v322 = vsel %vm86, %v304, 0.0
    %323 = vadd.xlane.f32.xlu0 %v322
    %v324 = vpop.xlane.xlu0 %323
    %v325 = vsel %vm86, %v305, 0.0
    %326 = vadd.xlane.f32.xlu0 %v325
    %v327 = vpop.xlane.xlu0 %326
    %v328 = vsel %vm86, %v306, 0.0
    %329 = vadd.xlane.f32.xlu0 %v328
    %v330 = vpop.xlane.xlu0 %329
    %v331 = vsel %vm86, %v307, 0.0
    %332 = vadd.xlane.f32.xlu0 %v331
    %v333 = vpop.xlane.xlu0 %332
    %v334 = vsel %vm86, %v308, 0.0
    %335 = vadd.xlane.f32.xlu0 %v334
    %v336 = vpop.xlane.xlu0 %335
    %v337 = vsel %vm86, %v309, 0.0
    %338 = vadd.xlane.f32.xlu0 %v337
    %v339 = vpop.xlane.xlu0 %338
    %v340 = vsel %vm86, %v310, 0.0
    %341 = vadd.xlane.f32.xlu0 %v340
    %v342 = vpop.xlane.xlu0 %341
    %v343 = vsel %vm86, %v311, 0.0
    %344 = vadd.xlane.f32.xlu0 %v343
    %v345 = vpop.xlane.xlu0 %344
    %v346 = vsel %vm86, %v312, 0.0
    %347 = vadd.xlane.f32.xlu0 %v346
    %v348 = vpop.xlane.xlu0 %347
    %v349 = vsel %vm86, %v313, 0.0
    %350 = vadd.xlane.f32.xlu0 %v349
    %v351 = vpop.xlane.xlu0 %350
    %v352 = vsel %vm86, %v314, 0.0
    %353 = vadd.xlane.f32.xlu0 %v352
    %v354 = vpop.xlane.xlu0 %353
    %v355 = vsel %vm86, %v315, 0.0
    %356 = vadd.xlane.f32.xlu0 %v355
    %v357 = vpop.xlane.xlu0 %356
    %v358 = vsel %vm86, %v316, 0.0
    %359 = vadd.xlane.f32.xlu0 %v358
    %v360 = vpop.xlane.xlu0 %359
    %v361 = vsel %vm86, %v317, 0.0
    %362 = vadd.xlane.f32.xlu0 %v361
    %v363 = vpop.xlane.xlu0 %362
    %v364 = vsel %vm86, %v318, 0.0
    %365 = vadd.xlane.f32.xlu0 %v364
    %v366 = vpop.xlane.xlu0 %365
    %v367 = vmax.f32 %v321, %v333
    %v368 = vmax.f32 %v327, %v339
    %v369 = vmax.f32 %v367, %v345
    %v370 = vmax.f32 %v368, %v351
    %v371 = vmax.f32 %v369, %v357
    %v372 = vmax.f32 %v370, %v363
    %v373 = vmax.f32 %v371, %v372
    %v374 = vmax.f32 %v324, %v336
    %v375 = vmax.f32 %v330, %v342
    %v376 = vmax.f32 %v374, %v348
    %v377 = vmax.f32 %v375, %v354
    %v378 = vmax.f32 %v376, %v360
    %v379 = vmax.f32 %v377, %v366
    %v380 = vmax.f32 %v378, %v379
    %v381 = vsub.f32 %v321, %v373
    %v382 = vsub.f32 %v324, %v380
    %v383 = vsub.f32 %v327, %v373
    %v384 = vsub.f32 %v330, %v380
    %v385 = vsub.f32 %v333, %v373
    %v386 = vsub.f32 %v336, %v380
    %v387 = vsub.f32 %v339, %v373
    %v388 = vsub.f32 %v342, %v380
    %v389 = vsub.f32 %v345, %v373
    %v390 = vsub.f32 %v348, %v380
    %v391 = vsub.f32 %v351, %v373
    %v392 = vsub.f32 %v354, %v380
    %v393 = vsub.f32 %v357, %v373
    %v394 = vsub.f32 %v360, %v380
    %v395 = vsub.f32 %v363, %v373
    %v396 = vsub.f32 %v366, %v380
    %v397 = vmul.f32 %v381, 1.442695
    %v398 = vpow.pop %v397
    %v399 = vmul.f32 %v382, 1.442695
    %v400 = vpow.pop %v399
    %v401 = vmul.f32 %v383, 1.442695
    %v402 = vpow.pop %v401
    %v403 = vmul.f32 %v384, 1.442695
    %v404 = vpow.pop %v403
    %v405 = vmul.f32 %v385, 1.442695
    %v406 = vpow.pop %v405
    %v407 = vmul.f32 %v386, 1.442695
    %v408 = vpow.pop %v407
    %v409 = vmul.f32 %v387, 1.442695
    %v410 = vpow.pop %v409
    %v411 = vmul.f32 %v388, 1.442695
    %v412 = vpow.pop %v411
    %v413 = vmul.f32 %v389, 1.442695
    %v414 = vpow.pop %v413
    %v415 = vmul.f32 %v390, 1.442695
    %v416 = vpow.pop %v415
    %v417 = vmul.f32 %v391, 1.442695
    %v418 = vpow.pop %v417
    %v419 = vmul.f32 %v392, 1.442695
    %v420 = vpow.pop %v419
    %v421 = vmul.f32 %v393, 1.442695
    %v422 = vpow.pop %v421
    %v423 = vmul.f32 %v394, 1.442695
    %v424 = vpow.pop %v423
    %v425 = vmul.f32 %v395, 1.442695
    %v426 = vpow.pop %v425
    %v427 = vmul.f32 %v396, 1.442695
    %v428 = vpow.pop %v427
    %v429 = vadd.f32 %v398, %v402
    %v430 = vadd.f32 %v429, %v406
    %v431 = vadd.f32 %v430, %v410
    %v432 = vadd.f32 %v431, %v414
    %v433 = vadd.f32 %v432, %v418
    %v434 = vadd.f32 %v433, %v422
    %v435 = vadd.f32 %v434, %v426
    %v436 = vadd.f32 %v400, %v404
    %v437 = vadd.f32 %v436, %v408
    %v438 = vadd.f32 %v437, %v412
    %v439 = vadd.f32 %v438, %v416
    %v440 = vadd.f32 %v439, %v420
    %v441 = vadd.f32 %v440, %v424
    %v442 = vadd.f32 %v441, %v428
    %v443 = vrcp.pop %v435
    %v444 = vrcp.pop %v442
    %v445 = vmul.f32 %v398, %v443
    %v446 = vmul.f32 %v400, %v444
    %v447 = vmul.f32 %v402, %v443
    %v448 = vmul.f32 %v404, %v444
    %v449 = vmul.f32 %v406, %v443
    %v450 = vmul.f32 %v408, %v444
    %v451 = vmul.f32 %v410, %v443
    %v452 = vmul.f32 %v412, %v444
    %v453 = vmul.f32 %v414, %v443
    %v454 = vmul.f32 %v416, %v444
    %v455 = vmul.f32 %v418, %v443
    %v456 = vmul.f32 %v420, %v444
    %v457 = vmul.f32 %v422, %v443
    %v458 = vmul.f32 %v424, %v444
    %v459 = vmul.f32 %v426, %v443
    %v460 = vmul.f32 %v428, %v444
    %v461 = vmul.f32 %v445, %v59
    %v462 = vmul.f32 %v446, %v60
    %v463 = vmul.f32 %v447, %v61
    %v464 = vmul.f32 %v448, %v62
    %v465 = vmul.f32 %v449, %v63
    %v466 = vmul.f32 %v450, %v64
    %v467 = vmul.f32 %v451, %v65
    %v468 = vmul.f32 %v452, %v66
    %v469 = vmul.f32 %v453, %v67
    %v470 = vmul.f32 %v454, %v68
    %v471 = vmul.f32 %v455, %v69
    %v472 = vmul.f32 %v456, %v70
    %v473 = vmul.f32 %v457, %v71
    %v474 = vmul.f32 %v458, %v72
    %v475 = vmul.f32 %v459, %v73
    %v476 = vmul.f32 %v460, %v74
    %v477 = vsel %vm86, %v461, 0.0
    %v478 = vsel %vm86, %v463, 0.0
    %v479 = vadd.f32 %v477, %v478
    %v480 = vsel %vm86, %v465, 0.0
    %v481 = vadd.f32 %v479, %v480
    %v482 = vsel %vm86, %v467, 0.0
    %v483 = vadd.f32 %v481, %v482
    %v484 = vsel %vm86, %v469, 0.0
    %v485 = vadd.f32 %v483, %v484
    %v486 = vsel %vm86, %v471, 0.0
    %v487 = vadd.f32 %v485, %v486
    %v488 = vsel %vm86, %v473, 0.0
    %v489 = vadd.f32 %v487, %v488
    %v490 = vsel %vm86, %v475, 0.0
    %v491 = vadd.f32 %v489, %v490
    %v492 = vsel %vm86, %v462, 0.0
    %v493 = vsel %vm86, %v464, 0.0
    %v494 = vadd.f32 %v492, %v493
    %v495 = vsel %vm86, %v466, 0.0
    %v496 = vadd.f32 %v494, %v495
    %v497 = vsel %vm86, %v468, 0.0
    %v498 = vadd.f32 %v496, %v497
    %v499 = vsel %vm86, %v470, 0.0
    %v500 = vadd.f32 %v498, %v499
    %v501 = vsel %vm86, %v472, 0.0
    %v502 = vadd.f32 %v500, %v501
    %v503 = vsel %vm86, %v474, 0.0
    %v504 = vadd.f32 %v502, %v503
    %v505 = vsel %vm86, %v476, 0.0
    %v506 = vadd.f32 %v504, %v505
    %507 = vst.msk [vmem:[#allocation8] sm:$0xff] %vm86, %v491
    %508 = vst.msk [vmem:[#allocation8 + $0x8] sm:$0xff] %vm86, %v506
    %v525 = vlaneseq
    %v526 = vand.u32 %v525, 127
    %v527 = vlaneseq
    %v528 = vshrl.u32 %v527, 7
    %v529 = vsub.s32 %v526, %v528
    %v530 = vrot.slane %v445, %v529
    %v531 = vadd.s32 %v526, 4294967288
    %v532 = vlaneseq
    %v533 = vshrl.u32 %v532, 7
    %v534 = vsub.s32 %v531, %v533
    %v535 = vrot.slane %v446, %v534
    %vm536 = vcmask 130112
    %v537 = vsel %vm536, %v535, %v530
    %v538 = vlaneseq
    %v539 = vshrl.u32 %v538, 7
    %v540 = vsub.s32 %v526, %v539
    %v541 = vrot.slane %v447, %v540
    %v542 = vlaneseq
    %v543 = vshrl.u32 %v542, 7
    %v544 = vsub.s32 %v531, %v543
    %v545 = vrot.slane %v448, %v544
    %v546 = vsel %vm536, %v545, %v541
    %v547 = vlaneseq
    %v548 = vshrl.u32 %v547, 7
    %v549 = vsub.s32 %v526, %v548
    %v550 = vrot.slane %v449, %v549
    %v551 = vlaneseq
    %v552 = vshrl.u32 %v551, 7
    %v553 = vsub.s32 %v531, %v552
    %v554 = vrot.slane %v450, %v553
    %v555 = vsel %vm536, %v554, %v550
    %v556 = vlaneseq
    %v557 = vshrl.u32 %v556, 7
    %v558 = vsub.s32 %v526, %v557
    %v559 = vrot.slane %v451, %v558
    %v560 = vlaneseq
    %v561 = vshrl.u32 %v560, 7
    %v562 = vsub.s32 %v531, %v561
    %v563 = vrot.slane %v452, %v562
    %v564 = vsel %vm536, %v563, %v559
    %v565 = vlaneseq
    %v566 = vshrl.u32 %v565, 7
    %v567 = vsub.s32 %v526, %v566
    %v568 = vrot.slane %v453, %v567
    %v569 = vlaneseq
    %v570 = vshrl.u32 %v569, 7
    %v571 = vsub.s32 %v531, %v570
    %v572 = vrot.slane %v454, %v571
    %v573 = vsel %vm536, %v572, %v568
    %v574 = vlaneseq
    %v575 = vshrl.u32 %v574, 7
    %v576 = vsub.s32 %v526, %v575
    %v577 = vrot.slane %v455, %v576
    %v578 = vlaneseq
    %v579 = vshrl.u32 %v578, 7
    %v580 = vsub.s32 %v531, %v579
    %v581 = vrot.slane %v456, %v580
    %v582 = vsel %vm536, %v581, %v577
    %v583 = vlaneseq
    %v584 = vshrl.u32 %v583, 7
    %v585 = vsub.s32 %v526, %v584
    %v586 = vrot.slane %v457, %v585
    %v587 = vlaneseq
    %v588 = vshrl.u32 %v587, 7
    %v589 = vsub.s32 %v531, %v588
    %v590 = vrot.slane %v458, %v589
    %v591 = vsel %vm536, %v590, %v586
    %v592 = vlaneseq
    %v593 = vshrl.u32 %v592, 7
    %v594 = vsub.s32 %v526, %v593
    %v595 = vrot.slane %v459, %v594
    %v596 = vlaneseq
    %v597 = vshrl.u32 %v596, 7
    %v598 = vsub.s32 %v531, %v597
    %v599 = vrot.slane %v460, %v598
    %v600 = vsel %vm536, %v599, %v595
    %vm601 = vcmask 1041409
    %v602 = vsel %vm601, %v546, %v537
    %vm603 = vcmask 1042434
    %v604 = vsel %vm603, %v555, %v602
    %vm605 = vcmask 1043459
    %v606 = vsel %vm605, %v564, %v604
    %vm607 = vcmask 1044484
    %v608 = vsel %vm607, %v573, %v606
    %vm609 = vcmask 1045509
    %v610 = vsel %vm609, %v582, %v608
    %vm611 = vcmask 1046534
    %v612 = vsel %vm611, %v591, %v610
    %vm613 = vcmask 1047559
    %v614 = vsel %vm613, %v600, %v612
    %616 = vxpose.xlu0.b32.start [1/16] %v614, 128
    %617 = vxpose.xlu0.b32.cont [2/16] 0.0, 128
    %618 = vxpose.xlu0.b32.cont [3/16] 0.0, 128
    %619 = vxpose.xlu0.b32.cont [4/16] 0.0, 128
    %620 = vxpose.xlu0.b32.cont [5/16] 0.0, 128
    %621 = vxpose.xlu0.b32.cont [6/16] 0.0, 128
    %622 = vxpose.xlu0.b32.cont [7/16] 0.0, 128
    %623 = vxpose.xlu0.b32.cont [8/16] 0.0, 128
    %624 = vxpose.xlu0.b32.cont [9/16] 0.0, 128
    %625 = vxpose.xlu0.b32.cont [10/16] 0.0, 128
    %626 = vxpose.xlu0.b32.cont [11/16] 0.0, 128
    %627 = vxpose.xlu0.b32.cont [12/16] 0.0, 128
    %628 = vxpose.xlu0.b32.cont [13/16] 0.0, 128
    %629 = vxpose.xlu0.b32.cont [14/16] 0.0, 128
    %630 = vxpose.xlu0.b32.cont [15/16] 0.0, 128
    %631 = vxpose.xlu0.b32.end [16/16] 0.0, 128
    %v632 = vpop.trf.xlu0
    %v633 = vpop.trf.xlu0
    %v634 = vpop.trf.xlu0
    %v635 = vpop.trf.xlu0
    %v636 = vpop.trf.xlu0
    %v637 = vpop.trf.xlu0
    %v638 = vpop.trf.xlu0
    %v639 = vpop.trf.xlu0
    %v640 = vpop.trf.xlu0
    %v641 = vpop.trf.xlu0
    %v642 = vpop.trf.xlu0
    %v643 = vpop.trf.xlu0
    %v644 = vpop.trf.xlu0
    %v645 = vpop.trf.xlu0
    %v646 = vpop.trf.xlu0
    %v647 = vpop.trf.xlu0
    %vm648 = vcmask 64512
    %649 = vst.msk [vmem:[%s5] sm:$0xff] %vm648, %v632
    %650 = vst.msk [vmem:[%s5 + $0x8] sm:$0xff] %vm648, %v633
    // Predicated region
    $region30: #{tpu_custom_call.1} parent=1 // pred_check
      _
    $region31: #{tpu_custom_call.1} parent=1 // pred_check_branch
      %652 = sbr.rel (0) target = $region33
    $region32: #{tpu_custom_call.1} parent=1 // pred_region
      %s654 = ssub.s32 256, 256
      %655 = vsyncadd [#allocation4], %s654
      %s656 = sshll.u32 [#allocation8], 4
      %s657 = int_to_ptr.vmem [resolvable:$true] %s656
      %662 = dma.vmem_to_hbm [thread:$0]  %s657, 256, %s4, [#allocation4], 128, 128, 8
    $region33: #{tpu_custom_call.1} parent=1 // pred_fallthru
      _
    // Predicated region
    $region34: #{tpu_custom_call.1} parent=1 // pred_check
      _
    $region35: #{tpu_custom_call.1} parent=1 // pred_check_branch
      %664 = sbr.rel (0) target = $region37
    $region36: #{tpu_custom_call.1} parent=1 // pred_region
      _
    $region37: #{tpu_custom_call.1} parent=1 // pred_fallthru
      _
    // Predicated region
    $region38: #{tpu_custom_call.1} parent=1 // pred_check
      _
    $region39: #{tpu_custom_call.1} parent=1 // pred_check_branch
      %666 = sbr.rel (0) target = $region41
    $region40: #{tpu_custom_call.1} parent=1 // pred_region
      %667 = dma.done [#allocation4], 256
    $region41: #{tpu_custom_call.1} parent=1 // pred_fallthru
      _
    // Predicated region
    $region42: #{tpu_custom_call.1} parent=1 // pred_check
      _
    $region43: #{tpu_custom_call.1} parent=1 // pred_check_branch
      %669 = sbr.rel (0) target = $region45
    $region44: #{tpu_custom_call.1} parent=1 // pred_region
      _
    $region45: #{tpu_custom_call.1} parent=1 // pred_fallthru
      _
    %670 = vsyncpa [#allocation3], 1
    %671 = vsyncpa [#allocation6], 1
    %672 = vsyncpa [#allocation4], 1

// kernel: tpu_custom_call.1
$region0: #{tpu_custom_call.1}
  #allocation0 [shape = 'u32[]', space=smem, size = 0x4, offset = 0x4, fixed_abs, tag = 'smem constant byte address 0x4 - core index']
  #allocation1 [shape = 'u32[144,128]{1,0:T(1,128)}', space=vmem, size = 0x12000, scoped, tag = 'internal scratch']
  %s0 = inlined_call_operand.hbm [shape: f32[1,32], index: 0, kind: input, shape index: {}]
  %s1 = inlined_call_operand.hbm [shape: f32[32,32], index: 1, kind: input, shape index: {}]
  %s2 = inlined_call_operand.vmem [shape: f32[1,32], index: 2, kind: input, shape index: {}]
  %s3 = inlined_call_operand.hbm [shape: f32[8,16,32], index: 3, kind: input, shape index: {}]
  %s4 = inlined_call_operand.hbm [shape: f32[16,32], index: 4, kind: output, shape index: {0}]
  %s5 = inlined_call_operand.vmem [shape: f32[16,8], index: 5, kind: output, shape index: {1}]
  %6 = xla_tuple %s4, %s5
  %s7 = sld [smem:[#allocation0]]
  $region46: #{tpu_custom_call.1} parent=0
    _
  %s9 = ssub.s32 1, %s7
  %s10 = scalar_select 0, %s9, %s7
  $region1: #{tpu_custom_call.1} parent=0
    #allocation2 [shape = 'u8[512]{0}', space=vmem, size = 0x400, scoped, tag = 'input window, operand 0, single buffered']
    #allocation3 [shape = 's32[1]{0}', space=sflag, size = 0x4, scoped, tag = 'scoped memory for tpu_custom_call.1']
    #allocation4 [shape = 's32[1]{0}', space=sflag, size = 0x4, scoped, tag = 'scoped memory for tpu_custom_call.1']
    #allocation5 [shape = 'u8[16384]{0}', space=vmem, size = 0x4000, scoped, tag = 'input window, operand 1, single buffered']
    #allocation6 [shape = 's32[1]{0}', space=sflag, size = 0x4, scoped, tag = 'scoped memory for tpu_custom_call.1']
    #allocation7 [shape = 'u8[65536]{0}', space=vmem, size = 0x10000, scoped, tag = 'input window, operand 3, single buffered']
    #allocation8 [shape = 'u8[8192]{0}', space=vmem, size = 0x2000, scoped, tag = 'output window, operand 0, single buffered']
    %11 = vsyncpa [#allocation3], 0
    %12 = vsyncpa [#allocation6], 0
    %13 = vsyncpa [#allocation4], 0
    // Predicated region
    $region2: #{tpu_custom_call.1} parent=1 // pred_check
      _
    $region3: #{tpu_custom_call.1} parent=1 // pred_check_branch
      %15 = sbr.rel (0) target = $region5
    $region4: #{tpu_custom_call.1} parent=1 // pred_region
      %s17 = ssub.s32 16, 16
      %18 = vsyncadd [#allocation3], %s17
      %s20 = sshll.u32 [#allocation2], 4
      %s21 = int_to_ptr.vmem [resolvable:$true] %s20
      %23 = dma.hbm_to_vmem [thread:$0]  %s0, 16, %s21, [#allocation3]
    $region5: #{tpu_custom_call.1} parent=1 // pred_fallthru
      _
    // Predicated region
    $region6: #{tpu_custom_call.1} parent=1 // pred_check
      _
    $region7: #{tpu_custom_call.1} parent=1 // pred_check_branch
      %25 = sbr.rel (0) target = $region9
    $region8: #{tpu_custom_call.1} parent=1 // pred_region
      %s27 = ssub.s32 512, 512
      %28 = vsyncadd [#allocation6], %s27
      %s29 = sshll.u32 [#allocation5], 4
      %s30 = int_to_ptr.vmem [resolvable:$true] %s29
      %35 = dma.hbm_to_vmem [thread:$0]  %s1, 512, %s30, [#allocation6], 128, 128, 8
    $region9: #{tpu_custom_call.1} parent=1 // pred_fallthru
      _
    // Predicated region
    $region10: #{tpu_custom_call.1} parent=1 // pred_check
      _
    $region11: #{tpu_custom_call.1} parent=1 // pred_check_branch
      %37 = sbr.rel (0) target = $region13
    $region12: #{tpu_custom_call.1} parent=1 // pred_region
      _
    $region13: #{tpu_custom_call.1} parent=1 // pred_fallthru
      _
    // Predicated region
    $region14: #{tpu_custom_call.1} parent=1 // pred_check
      _
    $region15: #{tpu_custom_call.1} parent=1 // pred_check_branch
      %39 = sbr.rel (0) target = $region17
    $region16: #{tpu_custom_call.1} parent=1 // pred_region
      %s41 = ssub.s32 2048, 2048
      %42 = vsyncadd [#allocation6], %s41
      %s43 = sshll.u32 [#allocation7], 4
      %s44 = int_to_ptr.vmem [resolvable:$true] %s43
      %49 = dma.hbm_to_vmem [thread:$0]  %s3, 2048, %s44, [#allocation6], 128, 128, 8
    $region17: #{tpu_custom_call.1} parent=1 // pred_fallthru
      _
    // Predicated region
    $region18: #{tpu_custom_call.1} parent=1 // pred_check
      _
    $region19: #{tpu_custom_call.1} parent=1 // pred_check_branch
      %51 = sbr.rel (0) target = $region21
    $region20: #{tpu_custom_call.1} parent=1 // pred_region
      %52 = dma.done [#allocation3], 16
    $region21: #{tpu_custom_call.1} parent=1 // pred_fallthru
      _
    // Predicated region
    $region22: #{tpu_custom_call.1} parent=1 // pred_check
      _
    $region23: #{tpu_custom_call.1} parent=1 // pred_check_branch
      %54 = sbr.rel (0) target = $region25
    $region24: #{tpu_custom_call.1} parent=1 // pred_region
      %55 = dma.done [#allocation6], 512
    $region25: #{tpu_custom_call.1} parent=1 // pred_fallthru
      _
    // Predicated region
    $region26: #{tpu_custom_call.1} parent=1 // pred_check
      _
    $region27: #{tpu_custom_call.1} parent=1 // pred_check_branch
      %57 = sbr.rel (0) target = $region29
    $region28: #{tpu_custom_call.1} parent=1 // pred_region
      %58 = dma.done [#allocation6], 2048
    $region29: #{tpu_custom_call.1} parent=1 // pred_fallthru
      _
    %v59 = vld [vmem:[#allocation7] sm:$0xff]
    %v60 = vld [vmem:[#allocation7 + $0x8] sm:$0xff]
    %v61 = vld [vmem:[#allocation7 + $0x10] sm:$0xff]
    %v62 = vld [vmem:[#allocation7 + $0x18] sm:$0xff]
    %v63 = vld [vmem:[#allocation7 + $0x20] sm:$0xff]
    %v64 = vld [vmem:[#allocation7 + $0x28] sm:$0xff]
    %v65 = vld [vmem:[#allocation7 + $0x30] sm:$0xff]
    %v66 = vld [vmem:[#allocation7 + $0x38] sm:$0xff]
    %v67 = vld [vmem:[#allocation7 + $0x40] sm:$0xff]
    %v68 = vld [vmem:[#allocation7 + $0x48] sm:$0xff]
    %v69 = vld [vmem:[#allocation7 + $0x50] sm:$0xff]
    %v70 = vld [vmem:[#allocation7 + $0x58] sm:$0xff]
    %v71 = vld [vmem:[#allocation7 + $0x60] sm:$0xff]
    %v72 = vld [vmem:[#allocation7 + $0x68] sm:$0xff]
    %v73 = vld [vmem:[#allocation7 + $0x70] sm:$0xff]
    %v74 = vld [vmem:[#allocation7 + $0x78] sm:$0xff]
    %v75 = vld [vmem:[#allocation5] sm:$0xff]
    %v76 = vld [vmem:[#allocation5 + $0x8] sm:$0xff]
    %v77 = vld [vmem:[#allocation5 + $0x10] sm:$0xff]
    %v78 = vld [vmem:[#allocation5 + $0x18] sm:$0xff]
    %v79 = vld [vmem:[#allocation2] sm:$0x1]
    %v81 = vlaneseq
    %v82 = vshrl.u32 %v81, 7
    %v83 = vsub.s32 0, %v82
    %v84 = vrot.slane %v79, %v83
    %vm86 = vcmask 261120
    %v88 = vsel %vm86, %v59, 0
    %v91 = vsel %vm86, %v60, 0
    %v94 = vsel %vm86, %v61, 0
    %v97 = vsel %vm86, %v62, 0
    %v100 = vsel %vm86, %v63, 0
    %v103 = vsel %vm86, %v64, 0
    %v106 = vsel %vm86, %v65, 0
    %v109 = vsel %vm86, %v66, 0
    %v112 = vsel %vm86, %v67, 0
    %v115 = vsel %vm86, %v68, 0
    %v118 = vsel %vm86, %v69, 0
    %v121 = vsel %vm86, %v70, 0
    %v124 = vsel %vm86, %v71, 0
    %v127 = vsel %vm86, %v72, 0
    %v130 = vsel %vm86, %v73, 0
    %v133 = vsel %vm86, %v74, 0
    %135 = vmatprep.subr.mxu0 0.0
    %136 = vmatpush1.msra.mxu0 0.0
    %137 = vmatprep.subr.mxu0 0.0
    %138 = vmatpush1.msra.mxu0 0.0
    %139 = vmatprep.subr.mxu0 0.0
    %140 = vmatpush1.msra.mxu0 0.0
    %141 = vmatprep.subr.mxu0 0.0
    %142 = vmatpush1.msra.mxu0 0.0
    %143 = vmatprep.subr.mxu0 0.0
    %144 = vmatpush1.msra.mxu0 0.0
    %145 = vmatprep.subr.mxu0 0.0
    %146 = vmatpush1.msra.mxu0 0.0
    %147 = vmatprep.subr.mxu0 0.0
    %148 = vmatpush1.msra.mxu0 0.0
    %149 = vmatprep.subr.mxu0 0.0
    %150 = vmatpush1.msra.mxu0 0.0
    %151 = vmatprep.subr.mxu0 0.0
    %152 = vmatpush1.msra.mxu0 0.0
    %153 = vmatprep.subr.mxu0 0.0
    %154 = vmatpush1.msra.mxu0 0.0
    %155 = vmatprep.subr.mxu0 0.0
    %156 = vmatpush1.msra.mxu0 0.0
    %157 = vmatprep.subr.mxu0 0.0
    %158 = vmatpush1.msra.mxu0 0.0
    %159 = vmatprep.subr.mxu0 0.0
    %160 = vmatpush1.msra.mxu0 %v78
    %161 = vmatprep.subr.mxu0 0.0
    %162 = vmatpush1.msra.mxu0 %v77
    %163 = vmatprep.subr.mxu0 0.0
    %164 = vmatpush1.msra.mxu0 %v76
    %165 = vmatprep.subr.mxu0 0.0
    %166 = vmatpush1.msra.mxu0 %v75
    %167 = vmatprep.subr.mxu0 0.0
    %168 = vmatpush2.msra.mxu0 0.0
    %169 = vmatprep.subr.mxu0 0.0
    %170 = vmatpush2.msra.mxu0 0.0
    %171 = vmatprep.subr.mxu0 0.0
    %172 = vmatpush2.msra.mxu0 0.0
    %173 = vmatprep.subr.mxu0 0.0
    %174 = vmatpush2.msra.mxu0 0.0
    %175 = vmatprep.subr.mxu0 0.0
    %176 = vmatpush2.msra.mxu0 0.0
    %177 = vmatprep.subr.mxu0 0.0
    %178 = vmatpush2.msra.mxu0 0.0
    %179 = vmatprep.subr.mxu0 0.0
    %180 = vmatpush2.msra.mxu0 0.0
    %181 = vmatprep.subr.mxu0 0.0
    %182 = vmatpush2.msra.mxu0 0.0
    %183 = vmatprep.subr.mxu0 0.0
    %184 = vmatpush2.msra.mxu0 0.0
    %185 = vmatprep.subr.mxu0 0.0
    %186 = vmatpush2.msra.mxu0 0.0
    %187 = vmatprep.subr.mxu0 0.0
    %188 = vmatpush2.msra.mxu0 0.0
    %189 = vmatprep.subr.mxu0 0.0
    %190 = vmatpush2.msra.mxu0 0.0
    %191 = vmatprep.subr.mxu0 0.0
    %192 = vmatpush2.msra.mxu0 0.0
    %193 = vmatprep.subr.mxu0 0.0
    %194 = vmatpush2.msra.mxu0 0.0
    %195 = vmatprep.subr.mxu0 0.0
    %196 = vmatpush2.msra.mxu0 0.0
    %197 = vmatprep.subr.mxu0 0.0
    %198 = vmatpush2.msra.mxu0 0.0
    %199 = vmatprep.mubr.f32.mxu0 0.0
    %200 = vmatmul.mubr.f32.gmra.mxu0 %v88
    %v201 = vpop.f32.mrf.mxu0
    %v202 = vadd.f32 %v84, %v201
    %v203 = vpop.f32.mrf.mxu0
    %204 = vmatprep.mubr.f32.mxu0 0.0
    %205 = vmatmul.mubr.f32.gmra.mxu0 %v91
    %v206 = vpop.f32.mrf.mxu0
    %v207 = vadd.f32 %v84, %v206
    %v208 = vpop.f32.mrf.mxu0
    %209 = vmatprep.mubr.f32.mxu0 0.0
    %210 = vmatmul.mubr.f32.gmra.mxu0 %v94
    %v211 = vpop.f32.mrf.mxu0
    %v212 = vadd.f32 %v84, %v211
    %v213 = vpop.f32.mrf.mxu0
    %214 = vmatprep.mubr.f32.mxu0 0.0
    %215 = vmatmul.mubr.f32.gmra.mxu0 %v97
    %v216 = vpop.f32.mrf.mxu0
    %v217 = vadd.f32 %v84, %v216
    %v218 = vpop.f32.mrf.mxu0
    %219 = vmatprep.mubr.f32.mxu0 0.0
    %220 = vmatmul.mubr.f32.gmra.mxu0 %v100
    %v221 = vpop.f32.mrf.mxu0
    %v222 = vadd.f32 %v84, %v221
    %v223 = vpop.f32.mrf.mxu0
    %224 = vmatprep.mubr.f32.mxu0 0.0
    %225 = vmatmul.mubr.f32.gmra.mxu0 %v103
    %v226 = vpop.f32.mrf.mxu0
    %v227 = vadd.f32 %v84, %v226
    %v228 = vpop.f32.mrf.mxu0
    %229 = vmatprep.mubr.f32.mxu0 0.0
    %230 = vmatmul.mubr.f32.gmra.mxu0 %v106
    %v231 = vpop.f32.mrf.mxu0
    %v232 = vadd.f32 %v84, %v231
    %v233 = vpop.f32.mrf.mxu0
    %234 = vmatprep.mubr.f32.mxu0 0.0
    %235 = vmatmul.mubr.f32.gmra.mxu0 %v109
    %v236 = vpop.f32.mrf.mxu0
    %v237 = vadd.f32 %v84, %v236
    %v238 = vpop.f32.mrf.mxu0
    %239 = vmatprep.mubr.f32.mxu0 0.0
    %240 = vmatmul.mubr.f32.gmra.mxu0 %v112
    %v241 = vpop.f32.mrf.mxu0
    %v242 = vadd.f32 %v84, %v241
    %v243 = vpop.f32.mrf.mxu0
    %244 = vmatprep.mubr.f32.mxu0 0.0
    %245 = vmatmul.mubr.f32.gmra.mxu0 %v115
    %v246 = vpop.f32.mrf.mxu0
    %v247 = vadd.f32 %v84, %v246
    %v248 = vpop.f32.mrf.mxu0
    %249 = vmatprep.mubr.f32.mxu0 0.0
    %250 = vmatmul.mubr.f32.gmra.mxu0 %v118
    %v251 = vpop.f32.mrf.mxu0
    %v252 = vadd.f32 %v84, %v251
    %v253 = vpop.f32.mrf.mxu0
    %254 = vmatprep.mubr.f32.mxu0 0.0
    %255 = vmatmul.mubr.f32.gmra.mxu0 %v121
    %v256 = vpop.f32.mrf.mxu0
    %v257 = vadd.f32 %v84, %v256
    %v258 = vpop.f32.mrf.mxu0
    %259 = vmatprep.mubr.f32.mxu0 0.0
    %260 = vmatmul.mubr.f32.gmra.mxu0 %v124
    %v261 = vpop.f32.mrf.mxu0
    %v262 = vadd.f32 %v84, %v261
    %v263 = vpop.f32.mrf.mxu0
    %264 = vmatprep.mubr.f32.mxu0 0.0
    %265 = vmatmul.mubr.f32.gmra.mxu0 %v127
    %v266 = vpop.f32.mrf.mxu0
    %v267 = vadd.f32 %v84, %v266
    %v268 = vpop.f32.mrf.mxu0
    %269 = vmatprep.mubr.f32.mxu0 0.0
    %270 = vmatmul.mubr.f32.gmra.mxu0 %v130
    %v271 = vpop.f32.mrf.mxu0
    %v272 = vadd.f32 %v84, %v271
    %v273 = vpop.f32.mrf.mxu0
    %274 = vmatprep.mubr.f32.mxu0 0.0
    %275 = vmatmul.mubr.f32.gmra.mxu0 %v133
    %v276 = vpop.f32.mrf.mxu0
    %v277 = vadd.f32 %v84, %v276
    %v278 = vpop.f32.mrf.mxu0
    %279 = vdwg.mxu0
    %v280 = vtanh.pop %v202
    %v281 = vtanh.pop %v207
    %v282 = vtanh.pop %v212
    %v283 = vtanh.pop %v217
    %v284 = vtanh.pop %v222
    %v285 = vtanh.pop %v227
    %v286 = vtanh.pop %v232
    %v287 = vtanh.pop %v237
    %v288 = vtanh.pop %v242
    %v289 = vtanh.pop %v247
    %v290 = vtanh.pop %v252
    %v291 = vtanh.pop %v257
    %v292 = vtanh.pop %v262
    %v293 = vtanh.pop %v267
    %v294 = vtanh.pop %v272
    %v295 = vtanh.pop %v277
    %v296 = vld [vmem:[%s2] sm:$0x1]
    %v298 = vlaneseq
    %v299 = vshrl.u32 %v298, 7
    %v300 = vsub.s32 0, %v299
    %v301 = vrot.slane %v296, %v300
    %v303 = vmul.f32 %v280, %v301
    %v304 = vmul.f32 %v281, %v301
    %v305 = vmul.f32 %v282, %v301
    %v306 = vmul.f32 %v283, %v301
    %v307 = vmul.f32 %v284, %v301
    %v308 = vmul.f32 %v285, %v301
    %v309 = vmul.f32 %v286, %v301
    %v310 = vmul.f32 %v287, %v301
    %v311 = vmul.f32 %v288, %v301
    %v312 = vmul.f32 %v289, %v301
    %v313 = vmul.f32 %v290, %v301
    %v314 = vmul.f32 %v291, %v301
    %v315 = vmul.f32 %v292, %v301
    %v316 = vmul.f32 %v293, %v301
    %v317 = vmul.f32 %v294, %v301
    %v318 = vmul.f32 %v295, %v301
    %v319 = vsel %vm86, %v303, 0.0
    %320 = vadd.xlane.f32.xlu0 %v319
    %v321 = vpop.xlane.xlu0 %320
    %v322 = vsel %vm86, %v304, 0.0
    %323 = vadd.xlane.f32.xlu0 %v322
    %v324 = vpop.xlane.xlu0 %323
    %v325 = vsel %vm86, %v305, 0.0
    %326 = vadd.xlane.f32.xlu0 %v325
    %v327 = vpop.xlane.xlu0 %326
    %v328 = vsel %vm86, %v306, 0.0
    %329 = vadd.xlane.f32.xlu0 %v328
    %v330 = vpop.xlane.xlu0 %329
    %v331 = vsel %vm86, %v307, 0.0
    %332 = vadd.xlane.f32.xlu0 %v331
    %v333 = vpop.xlane.xlu0 %332
    %v334 = vsel %vm86, %v308, 0.0
    %335 = vadd.xlane.f32.xlu0 %v334
    %v336 = vpop.xlane.xlu0 %335
    %v337 = vsel %vm86, %v309, 0.0
    %338 = vadd.xlane.f32.xlu0 %v337
    %v339 = vpop.xlane.xlu0 %338
    %v340 = vsel %vm86, %v310, 0.0
    %341 = vadd.xlane.f32.xlu0 %v340
    %v342 = vpop.xlane.xlu0 %341
    %v343 = vsel %vm86, %v311, 0.0
    %344 = vadd.xlane.f32.xlu0 %v343
    %v345 = vpop.xlane.xlu0 %344
    %v346 = vsel %vm86, %v312, 0.0
    %347 = vadd.xlane.f32.xlu0 %v346
    %v348 = vpop.xlane.xlu0 %347
    %v349 = vsel %vm86, %v313, 0.0
    %350 = vadd.xlane.f32.xlu0 %v349
    %v351 = vpop.xlane.xlu0 %350
    %v352 = vsel %vm86, %v314, 0.0
    %353 = vadd.xlane.f32.xlu0 %v352
    %v354 = vpop.xlane.xlu0 %353
    %v355 = vsel %vm86, %v315, 0.0
    %356 = vadd.xlane.f32.xlu0 %v355
    %v357 = vpop.xlane.xlu0 %356
    %v358 = vsel %vm86, %v316, 0.0
    %359 = vadd.xlane.f32.xlu0 %v358
    %v360 = vpop.xlane.xlu0 %359
    %v361 = vsel %vm86, %v317, 0.0
    %362 = vadd.xlane.f32.xlu0 %v361
    %v363 = vpop.xlane.xlu0 %362
    %v364 = vsel %vm86, %v318, 0.0
    %365 = vadd.xlane.f32.xlu0 %v364
    %v366 = vpop.xlane.xlu0 %365
    %v367 = vmax.f32 %v321, %v333
    %v368 = vmax.f32 %v327, %v339
    %v369 = vmax.f32 %v367, %v345
    %v370 = vmax.f32 %v368, %v351
    %v371 = vmax.f32 %v369, %v357
    %v372 = vmax.f32 %v370, %v363
    %v373 = vmax.f32 %v371, %v372
    %v374 = vmax.f32 %v324, %v336
    %v375 = vmax.f32 %v330, %v342
    %v376 = vmax.f32 %v374, %v348
    %v377 = vmax.f32 %v375, %v354
    %v378 = vmax.f32 %v376, %v360
    %v379 = vmax.f32 %v377, %v366
    %v380 = vmax.f32 %v378, %v379
    %v381 = vsub.f32 %v321, %v373
    %v382 = vsub.f32 %v324, %v380
    %v383 = vsub.f32 %v327, %v373
    %v384 = vsub.f32 %v330, %v380
    %v385 = vsub.f32 %v333, %v373
    %v386 = vsub.f32 %v336, %v380
    %v387 = vsub.f32 %v339, %v373
    %v388 = vsub.f32 %v342, %v380
    %v389 = vsub.f32 %v345, %v373
    %v390 = vsub.f32 %v348, %v380
    %v391 = vsub.f32 %v351, %v373
    %v392 = vsub.f32 %v354, %v380
    %v393 = vsub.f32 %v357, %v373
    %v394 = vsub.f32 %v360, %v380
    %v395 = vsub.f32 %v363, %v373
    %v396 = vsub.f32 %v366, %v380
    %v397 = vmul.f32 %v381, 1.442695
    %v398 = vpow.pop %v397
    %v399 = vmul.f32 %v382, 1.442695
    %v400 = vpow.pop %v399
    %v401 = vmul.f32 %v383, 1.442695
    %v402 = vpow.pop %v401
    %v403 = vmul.f32 %v384, 1.442695
    %v404 = vpow.pop %v403
    %v405 = vmul.f32 %v385, 1.442695
    %v406 = vpow.pop %v405
    %v407 = vmul.f32 %v386, 1.442695
    %v408 = vpow.pop %v407
    %v409 = vmul.f32 %v387, 1.442695
    %v410 = vpow.pop %v409
    %v411 = vmul.f32 %v388, 1.442695
    %v412 = vpow.pop %v411
    %v413 = vmul.f32 %v389, 1.442695
    %v414 = vpow.pop %v413
    %v415 = vmul.f32 %v390, 1.442695
    %v416 = vpow.pop %v415
    %v417 = vmul.f32 %v391, 1.442695
    %v418 = vpow.pop %v417
    %v419 = vmul.f32 %v392, 1.442695
    %v420 = vpow.pop %v419
    %v421 = vmul.f32 %v393, 1.442695
    %v422 = vpow.pop %v421
    %v423 = vmul.f32 %v394, 1.442695
    %v424 = vpow.pop %v423
    %v425 = vmul.f32 %v395, 1.442695
    %v426 = vpow.pop %v425
    %v427 = vmul.f32 %v396, 1.442695
    %v428 = vpow.pop %v427
    %v429 = vadd.f32 %v398, %v402
    %v430 = vadd.f32 %v429, %v406
    %v431 = vadd.f32 %v430, %v410
    %v432 = vadd.f32 %v431, %v414
    %v433 = vadd.f32 %v432, %v418
    %v434 = vadd.f32 %v433, %v422
    %v435 = vadd.f32 %v434, %v426
    %v436 = vadd.f32 %v400, %v404
    %v437 = vadd.f32 %v436, %v408
    %v438 = vadd.f32 %v437, %v412
    %v439 = vadd.f32 %v438, %v416
    %v440 = vadd.f32 %v439, %v420
    %v441 = vadd.f32 %v440, %v424
    %v442 = vadd.f32 %v441, %v428
    %v443 = vrcp.pop %v435
    %v444 = vrcp.pop %v442
    %v445 = vmul.f32 %v398, %v443
    %v446 = vmul.f32 %v400, %v444
    %v447 = vmul.f32 %v402, %v443
    %v448 = vmul.f32 %v404, %v444
    %v449 = vmul.f32 %v406, %v443
    %v450 = vmul.f32 %v408, %v444
    %v451 = vmul.f32 %v410, %v443
    %v452 = vmul.f32 %v412, %v444
    %v453 = vmul.f32 %v414, %v443
    %v454 = vmul.f32 %v416, %v444
    %v455 = vmul.f32 %v418, %v443
    %v456 = vmul.f32 %v420, %v444
    %v457 = vmul.f32 %v422, %v443
    %v458 = vmul.f32 %v424, %v444
    %v459 = vmul.f32 %v426, %v443
    %v460 = vmul.f32 %v428, %v444
    %v461 = vmul.f32 %v445, %v59
    %v462 = vmul.f32 %v446, %v60
    %v463 = vmul.f32 %v447, %v61
    %v464 = vmul.f32 %v448, %v62
    %v465 = vmul.f32 %v449, %v63
    %v466 = vmul.f32 %v450, %v64
    %v467 = vmul.f32 %v451, %v65
    %v468 = vmul.f32 %v452, %v66
    %v469 = vmul.f32 %v453, %v67
    %v470 = vmul.f32 %v454, %v68
    %v471 = vmul.f32 %v455, %v69
    %v472 = vmul.f32 %v456, %v70
    %v473 = vmul.f32 %v457, %v71
    %v474 = vmul.f32 %v458, %v72
    %v475 = vmul.f32 %v459, %v73
    %v476 = vmul.f32 %v460, %v74
    %v477 = vsel %vm86, %v461, 0.0
    %v478 = vsel %vm86, %v463, 0.0
    %v479 = vadd.f32 %v477, %v478
    %v480 = vsel %vm86, %v465, 0.0
    %v481 = vadd.f32 %v479, %v480
    %v482 = vsel %vm86, %v467, 0.0
    %v483 = vadd.f32 %v481, %v482
    %v484 = vsel %vm86, %v469, 0.0
    %v485 = vadd.f32 %v483, %v484
    %v486 = vsel %vm86, %v471, 0.0
    %v487 = vadd.f32 %v485, %v486
    %v488 = vsel %vm86, %v473, 0.0
    %v489 = vadd.f32 %v487, %v488
    %v490 = vsel %vm86, %v475, 0.0
    %v491 = vadd.f32 %v489, %v490
    %v492 = vsel %vm86, %v462, 0.0
    %v493 = vsel %vm86, %v464, 0.0
    %v494 = vadd.f32 %v492, %v493
    %v495 = vsel %vm86, %v466, 0.0
    %v496 = vadd.f32 %v494, %v495
    %v497 = vsel %vm86, %v468, 0.0
    %v498 = vadd.f32 %v496, %v497
    %v499 = vsel %vm86, %v470, 0.0
    %v500 = vadd.f32 %v498, %v499
    %v501 = vsel %vm86, %v472, 0.0
    %v502 = vadd.f32 %v500, %v501
    %v503 = vsel %vm86, %v474, 0.0
    %v504 = vadd.f32 %v502, %v503
    %v505 = vsel %vm86, %v476, 0.0
    %v506 = vadd.f32 %v504, %v505
    %507 = vst.msk [vmem:[#allocation8] sm:$0xff] %vm86, %v491
    %508 = vst.msk [vmem:[#allocation8 + $0x8] sm:$0xff] %vm86, %v506
    %v525 = vlaneseq
    %v526 = vand.u32 %v525, 127
    %v527 = vlaneseq
    %v528 = vshrl.u32 %v527, 7
    %v529 = vsub.s32 %v526, %v528
    %v530 = vrot.slane %v445, %v529
    %v531 = vadd.s32 %v526, 4294967288
    %v532 = vlaneseq
    %v533 = vshrl.u32 %v532, 7
    %v534 = vsub.s32 %v531, %v533
    %v535 = vrot.slane %v446, %v534
    %vm536 = vcmask 130112
    %v537 = vsel %vm536, %v535, %v530
    %v538 = vlaneseq
    %v539 = vshrl.u32 %v538, 7
    %v540 = vsub.s32 %v526, %v539
    %v541 = vrot.slane %v447, %v540
    %v542 = vlaneseq
    %v543 = vshrl.u32 %v542, 7
    %v544 = vsub.s32 %v531, %v543
    %v545 = vrot.slane %v448, %v544
    %v546 = vsel %vm536, %v545, %v541
    %v547 = vlaneseq
    %v548 = vshrl.u32 %v547, 7
    %v549 = vsub.s32 %v526, %v548
    %v550 = vrot.slane %v449, %v549
    %v551 = vlaneseq
    %v552 = vshrl.u32 %v551, 7
    %v553 = vsub.s32 %v531, %v552
    %v554 = vrot.slane %v450, %v553
    %v555 = vsel %vm536, %v554, %v550
    %v556 = vlaneseq
    %v557 = vshrl.u32 %v556, 7
    %v558 = vsub.s32 %v526, %v557
    %v559 = vrot.slane %v451, %v558
    %v560 = vlaneseq
    %v561 = vshrl.u32 %v560, 7
    %v562 = vsub.s32 %v531, %v561
    %v563 = vrot.slane %v452, %v562
    %v564 = vsel %vm536, %v563, %v559
    %v565 = vlaneseq
    %v566 = vshrl.u32 %v565, 7
    %v567 = vsub.s32 %v526, %v566
    %v568 = vrot.slane %v453, %v567
    %v569 = vlaneseq
    %v570 = vshrl.u32 %v569, 7
    %v571 = vsub.s32 %v531, %v570
    %v572 = vrot.slane %v454, %v571
    %v573 = vsel %vm536, %v572, %v568
    %v574 = vlaneseq
    %v575 = vshrl.u32 %v574, 7
    %v576 = vsub.s32 %v526, %v575
    %v577 = vrot.slane %v455, %v576
    %v578 = vlaneseq
    %v579 = vshrl.u32 %v578, 7
    %v580 = vsub.s32 %v531, %v579
    %v581 = vrot.slane %v456, %v580
    %v582 = vsel %vm536, %v581, %v577
    %v583 = vlaneseq
    %v584 = vshrl.u32 %v583, 7
    %v585 = vsub.s32 %v526, %v584
    %v586 = vrot.slane %v457, %v585
    %v587 = vlaneseq
    %v588 = vshrl.u32 %v587, 7
    %v589 = vsub.s32 %v531, %v588
    %v590 = vrot.slane %v458, %v589
    %v591 = vsel %vm536, %v590, %v586
    %v592 = vlaneseq
    %v593 = vshrl.u32 %v592, 7
    %v594 = vsub.s32 %v526, %v593
    %v595 = vrot.slane %v459, %v594
    %v596 = vlaneseq
    %v597 = vshrl.u32 %v596, 7
    %v598 = vsub.s32 %v531, %v597
    %v599 = vrot.slane %v460, %v598
    %v600 = vsel %vm536, %v599, %v595
    %vm601 = vcmask 1041409
    %v602 = vsel %vm601, %v546, %v537
    %vm603 = vcmask 1042434
    %v604 = vsel %vm603, %v555, %v602
    %vm605 = vcmask 1043459
    %v606 = vsel %vm605, %v564, %v604
    %vm607 = vcmask 1044484
    %v608 = vsel %vm607, %v573, %v606
    %vm609 = vcmask 1045509
    %v610 = vsel %vm609, %v582, %v608
    %vm611 = vcmask 1046534
    %v612 = vsel %vm611, %v591, %v610
    %vm613 = vcmask 1047559
    %v614 = vsel %vm613, %v600, %v612
    %616 = vxpose.xlu0.b32.start [1/16] %v614, 128
    %617 = vxpose.xlu0.b32.cont [2/16] 0.0, 128
    %618 = vxpose.xlu0.b32.cont [3/16] 0.0, 128
    %619 = vxpose.xlu0.b32.cont [4/16] 0.0, 128
    %620 = vxpose.xlu0.b32.cont [5/16] 0.0, 128
    %621 = vxpose.xlu0.b32.cont [6/16] 0.0, 128
    %622 = vxpose.xlu0.b32.cont [7/16] 0.0, 128
    %623 = vxpose.xlu0.b32.cont [8/16] 0.0, 128
    %624 = vxpose.xlu0.b32.cont [9/16] 0.0, 128
    %625 = vxpose.xlu0.b32.cont [10/16] 0.0, 128
    %626 = vxpose.xlu0.b32.cont [11/16] 0.0, 128
    %627 = vxpose.xlu0.b32.cont [12/16] 0.0, 128
    %628 = vxpose.xlu0.b32.cont [13/16] 0.0, 128
    %629 = vxpose.xlu0.b32.cont [14/16] 0.0, 128
    %630 = vxpose.xlu0.b32.cont [15/16] 0.0, 128
    %631 = vxpose.xlu0.b32.end [16/16] 0.0, 128
    %v632 = vpop.trf.xlu0
    %v633 = vpop.trf.xlu0
    %v634 = vpop.trf.xlu0
    %v635 = vpop.trf.xlu0
    %v636 = vpop.trf.xlu0
    %v637 = vpop.trf.xlu0
    %v638 = vpop.trf.xlu0
    %v639 = vpop.trf.xlu0
    %v640 = vpop.trf.xlu0
    %v641 = vpop.trf.xlu0
    %v642 = vpop.trf.xlu0
    %v643 = vpop.trf.xlu0
    %v644 = vpop.trf.xlu0
    %v645 = vpop.trf.xlu0
    %v646 = vpop.trf.xlu0
    %v647 = vpop.trf.xlu0
    %vm648 = vcmask 64512
    %649 = vst.msk [vmem:[%s5] sm:$0xff] %vm648, %v632
    %650 = vst.msk [vmem:[%s5 + $0x8] sm:$0xff] %vm648, %v633
    // Predicated region
    $region30: #{tpu_custom_call.1} parent=1 // pred_check
      _
    $region31: #{tpu_custom_call.1} parent=1 // pred_check_branch
      %652 = sbr.rel (0) target = $region33
    $region32: #{tpu_custom_call.1} parent=1 // pred_region
      %s654 = ssub.s32 256, 256
      %655 = vsyncadd [#allocation4], %s654
      %s656 = sshll.u32 [#allocation8], 4
      %s657 = int_to_ptr.vmem [resolvable:$true] %s656
      %662 = dma.vmem_to_hbm [thread:$0]  %s657, 256, %s4, [#allocation4], 128, 128, 8
    $region33: #{tpu_custom_call.1} parent=1 // pred_fallthru
      _
    // Predicated region
    $region34: #{tpu_custom_call.1} parent=1 // pred_check
      _
    $region35: #{tpu_custom_call.1} parent=1 // pred_check_branch
      %664 = sbr.rel (0) target = $region37
    $region36: #{tpu_custom_call.1} parent=1 // pred_region
      _
    $region37: #{tpu_custom_call.1} parent=1 // pred_fallthru
      _
    // Predicated region
    $region38: #{tpu_custom_call.1} parent=1 // pred_check
      _
    $region39: #{tpu_custom_call.1} parent=1 // pred_check_branch
      %666 = sbr.rel (0) target = $region41
    $region40: #{tpu_custom_call.1} parent=1 // pred_region
      %667 = dma.done [#allocation4], 256
    $region41: #{tpu_custom_call.1} parent=1 // pred_fallthru
      _
    // Predicated region
    $region42: #{tpu_custom_call.1} parent=1 // pred_check
      _
    $region43: #{tpu_custom_call.1} parent=1 // pred_check_branch
      %669 = sbr.rel (0) target = $region45
    $region44: #{tpu_custom_call.1} parent=1 // pred_region
      _
    $region45: #{tpu_custom_call.1} parent=1 // pred_fallthru
      _
    %670 = vsyncpa [#allocation3], 1
    %671 = vsyncpa [#allocation6], 1
    %672 = vsyncpa [#allocation4], 1

</llo_original>
